<compile_context>
chip_gen: v6e
topology: v6e:2x2x1
jax: 0.10.0
libtpu: 0.0.40
codegen_flags: <defaults>
</compile_context>

<pallas_src>
import math

import jax
import jax.numpy as jnp
from jax.experimental import pallas as pl
from jax.experimental.pallas import tpu as pltpu


# ---------------------------------------------------------------------------
# Kernels
# ---------------------------------------------------------------------------

def _splitk_kernel(w_ref, g_ref, out_ref):
    """'S' path: weight tile already matches the output tile column-for-column."""
    out_ref[...] = w_ref[...] * g_ref[...].astype(jnp.float32)


def _make_multirep_kernel(rep, K):
    """'M' path: one resident compressed-row chunk (TO, K) feeds `rep` replicas."""
    def kernel(w_ref, g_ref, out_ref):
        w = w_ref[...]                                   # (TO, K) f32
        for r in range(rep):                             # static slices = free ref views
            sl = slice(r * K, (r + 1) * K)
            out_ref[:, sl] = w * g_ref[:, sl].astype(jnp.float32)
    return kernel


# ---------------------------------------------------------------------------
# Tile selection helpers
# ---------------------------------------------------------------------------

def _divisors(n):
    return [d for d in range(1, n + 1) if n % d == 0]


def _pick_row_tile(out_features, want):
    """Largest divisor of out_features that is <= want and a multiple of 8,
    else the full dim (always legal)."""
    if out_features <= want:
        return out_features
    t = (want // 8) * 8
    while t >= 8:
        if out_features % t == 0:
            return t
        t -= 8
    return out_features


def _pick_splitk_lane_tile(K, want):
    """Largest multiple-of-128 divisor of K that is <= want (None if none)."""
    t = (min(K, want) // 128) * 128
    while t >= 128:
        if K % t == 0:
            return t
        t -= 128
    return None


# ---------------------------------------------------------------------------
# Forward
# ---------------------------------------------------------------------------

def ssl_transform_forward(weight_flat, g, *, redn_factor,
                          tile_out=256, tile_in=2048):
    """W = weight_flat[rolling_idx] * g, computed on TPU via Pallas.

    weight_flat: (out*K,) f32 compressed weight, K = in_features // redn_factor
    g:           (out, in) ±1 signs (int8 preferred; cast to f32 in-kernel)
    """
    out_features, in_features = g.shape
    assert redn_factor >= 1 and in_features % redn_factor == 0
    K = in_features // redn_factor
    assert weight_flat.shape == (out_features * K,)

    w2d = weight_flat.reshape(out_features, K).astype(jnp.float32)
    g_bytes = jnp.dtype(g.dtype).itemsize

    # ---- row (sublane) tile -------------------------------------------------
    TO = _pick_row_tile(out_features, tile_out)

    # ---- column (lane) tiling ----------------------------------------------
    if K <= tile_in:
        # 'M' path: whole compressed row chunk resident; output tile spans `rep`
        # replicas.  Lane tile must be a multiple of 128 or the full in-dim.
        legal = [r for r in _divisors(redn_factor)
                 if (r * K) % 128 == 0 or r == redn_factor]
        fit = [r for r in legal if r * K <= tile_in]
        rep = max(fit) if fit else min(legal)
        TI = rep * K
        mode = "M"
    else:
        ti = _pick_splitk_lane_tile(K, tile_in)
        if ti is not None:
            TI, mode = ti, "S"
        else:
            # awkward shape fallback: full-width blocks (always legal)
            rep, TI, mode = redn_factor, in_features, "M"

    grid_j = (K // TI) if mode == "S" else (in_features // TI)

    # ---- v7x megacore: make sure >= 2 steps along a parallel axis -----------
    while (out_features // TO) * grid_j < 2 and TO % 16 == 0:
        TO //= 2

    # ---- VMEM footprint guard + explicit limit -------------------------------
    def _footprint(to):
        w_tile = to * (TI if mode == "S" else K) * 4
        return 2 * (w_tile + to * TI * (g_bytes + 4))    # double-buffered

    while _footprint(TO) > (40 << 20) and TO % 16 == 0:
        TO //= 2
    vmem_limit = int(min(max(_footprint(TO) + (8 << 20), 32 << 20), 48 << 20))

    # ---- cost estimate (scheduling hint; kernel is purely mem-bound) --------
    cost = pl.CostEstimate(
        flops=out_features * in_features,
        transcendentals=0,
        bytes_accessed=out_features * in_features * (g_bytes + 4)
        + out_features * K * 4,
    )

    # ---- specs / grid --------------------------------------------------------
    if mode == "S":
        kb = K // TI
        grid = (out_features // TO, kb, redn_factor)
        in_specs = [
            # constant over the (last) replica axis -> Pallas skips the re-DMA
            pl.BlockSpec((TO, TI), lambda i, j, r: (i, j)),
            pl.BlockSpec((TO, TI), lambda i, j, r, _kb=kb: (i, r * _kb + j)),
        ]
        out_specs = pl.BlockSpec((TO, TI), lambda i, j, r, _kb=kb: (i, r * _kb + j))
        kernel = _splitk_kernel
        dims = ("parallel", "parallel", "arbitrary")
    else:
        grid = (out_features // TO, in_features // TI)
        in_specs = [
            # whole compressed-row chunk; re-fetched only when the row block changes
            pl.BlockSpec((TO, K), lambda i, j: (i, 0)),
            pl.BlockSpec((TO, TI), lambda i, j: (i, j)),
        ]
        out_specs = pl.BlockSpec((TO, TI), lambda i, j: (i, j))
        kernel = _make_multirep_kernel(TI // K, K)
        dims = ("parallel", "parallel")

    return pl.pallas_call(
        kernel,
        out_shape=jax.ShapeDtypeStruct((out_features, in_features), jnp.float32),
        grid_spec=pltpu.PrefetchScalarGridSpec(
            num_scalar_prefetch=0,
            grid=grid,
            in_specs=in_specs,
            out_specs=out_specs,
        ),
        compiler_params=pltpu.CompilerParams(
            dimension_semantics=dims,
            vmem_limit_bytes=vmem_limit,
        ),
        cost_estimate=cost,
    )(w2d, g)


# ---------------------------------------------------------------------------
# Debug helper (hoisted OUT of the forward path)
# ---------------------------------------------------------------------------

def assert_rolling_idx(idx, out_features, in_features, redn_factor):
    """One-time, host-blocking check that IDX is the rolling mapper the kernel assumes."""
    K = in_features // redn_factor
    o = jnp.arange(out_features, dtype=jnp.int32)[:, None]
    i = jnp.arange(in_features, dtype=jnp.int32)[None, :]
    expected = o * K + (i % K)
    if not bool(jnp.all(idx.astype(jnp.int32) == expected)):
        raise NotImplementedError(
            "ssl_transform_forward only supports the rolling mapper IDX "
            "(IDX[o,i] = o*K + i%K); got a non-rolling IDX.")


# ---------------------------------------------------------------------------
# Deterministic synthetic init matching the PyTorch module's __init__
# ---------------------------------------------------------------------------

def make_params(key, in_features, out_features, redn_factor):
    K = in_features // redn_factor
    wsize = out_features * K
    init_scale = 1.0 / math.sqrt(in_features)

    k_w, k_g = jax.random.split(key)
    weight = jax.random.uniform(
        k_w, (wsize,), dtype=jnp.float32, minval=-init_scale, maxval=init_scale)
    # G = randint(0, 2) * 2 - 1  -> ±1, stored compactly as int8
    g_i8 = (jax.random.randint(k_g, (out_features, in_features), 0, 2) * 2 - 1
            ).astype(jnp.int8)

    # rolling mapper IDX[o, i] = o*K + (i % K)
    o = jnp.arange(out_features, dtype=jnp.int32)[:, None]
    i = jnp.arange(in_features, dtype=jnp.int32)[None, :]
    idx = o * K + (i % K)
    return weight, idx, g_i8


if __name__ == "__main__":
    key = jax.random.PRNGKey(0)

    # ---- test 1: default tiles -> 'M' (resident compressed row) path --------
    in_features, out_features, redn_factor = 256, 128, 2
    weight, idx, g_i8 = make_params(key, in_features, out_features, redn_factor)
    assert_rolling_idx(idx, out_features, in_features, redn_factor)

    w_kernel = ssl_transform_forward(weight, g_i8, redn_factor=redn_factor)
    w_kernel = jax.block_until_ready(w_kernel)
    w_ref = weight[idx] * g_i8.astype(jnp.float32)
    assert w_kernel.shape == (out_features, in_features)
    assert w_kernel.dtype == jnp.float32
    assert jnp.array_equal(w_kernel, w_ref)       # exact: ±1 sign flip

    # ---- test 2: small tile_in to exercise the 'S' (3-D grid, replica-last) path
    in_features2, out_features2, redn_factor2 = 512, 64, 2
    weight2, idx2, g2 = make_params(jax.random.PRNGKey(1),
                                    in_features2, out_features2, redn_factor2)
    assert_rolling_idx(idx2, out_features2, in_features2, redn_factor2)

    w_kernel2 = ssl_transform_forward(weight2, g2, redn_factor=redn_factor2,
                                      tile_out=64, tile_in=128)
    w_kernel2 = jax.block_until_ready(w_kernel2)
    w_ref2 = weight2[idx2] * g2.astype(jnp.float32)
    assert jnp.array_equal(w_kernel2, w_ref2)

    print("KERNEL_OK")
</pallas_src>

<mosaic_0001>
module attributes {stable_mosaic.version = 11 : i64} {
  func.func @kernel(%arg0: i32, %arg1: i32, %arg2: memref<64x128xf32, #tpu.memory_space<vmem>>, %arg3: memref<64x256xi8, #tpu.memory_space<vmem>>, %arg4: memref<64x256xf32, #tpu.memory_space<vmem>>) attributes {dimension_semantics = [#tpu.dimension_semantics<parallel>, #tpu.dimension_semantics<parallel>], iteration_bounds = array<i64: 2, 1>, scalar_prefetch = 0 : i64, scratch_operands = 0 : i64, tpu.core_type = #tpu.core_type<tc>, window_params = [{transform_indices = @transform_0, window_bounds = array<i64: 64, 128>}, {transform_indices = @transform_1, window_bounds = array<i64: 64, 256>}, {transform_indices = @transform_2, window_bounds = array<i64: 64, 256>}]} {
    %c0 = arith.constant 0 : index
    %c0_0 = arith.constant 0 : index
    %0 = vector.load %arg2[%c0, %c0_0] : memref<64x128xf32, #tpu.memory_space<vmem>>, vector<64x128xf32>
    %c0_1 = arith.constant 0 : index
    %c0_2 = arith.constant 0 : index
    %1 = vector.load %arg3[%c0_1, %c0_2] : memref<64x256xi8, #tpu.memory_space<vmem>>, vector<64x128xi8>
    %2 = arith.sitofp %1 : vector<64x128xi8> to vector<64x128xf32>
    %3 = arith.mulf %0, %2 : vector<64x128xf32>
    %c0_3 = arith.constant 0 : index
    %c0_4 = arith.constant 0 : index
    %4 = vector.load %arg4[%c0_3, %c0_4] : memref<64x256xf32, #tpu.memory_space<vmem>>, vector<64x128xf32>
    tpu.vector_store %arg4[%c0_3, %c0_4], %3 {strides = array<i32>} : memref<64x256xf32, #tpu.memory_space<vmem>>, vector<64x128xf32>,
    %c0_5 = arith.constant 0 : index
    %c128 = arith.constant 128 : index
    %5 = vector.load %arg3[%c0_5, %c128] : memref<64x256xi8, #tpu.memory_space<vmem>>, vector<64x128xi8>
    %6 = arith.sitofp %5 : vector<64x128xi8> to vector<64x128xf32>
    %7 = arith.mulf %0, %6 : vector<64x128xf32>
    %c0_6 = arith.constant 0 : index
    %c128_7 = arith.constant 128 : index
    %8 = vector.load %arg4[%c0_6, %c128_7] : memref<64x256xf32, #tpu.memory_space<vmem>>, vector<64x128xf32>
    tpu.vector_store %arg4[%c0_6, %c128_7], %7 {strides = array<i32>} : memref<64x256xf32, #tpu.memory_space<vmem>>, vector<64x128xf32>,
    return
  }
  func.func @transform_0(%arg0: i32, %arg1: i32) -> (i32, i32) {
    %c0_i32 = arith.constant 0 : i32
    %c0_i32_0 = arith.constant 0 : i32
    return %arg0, %c0_i32 : i32, i32
  }
  func.func @transform_1(%arg0: i32, %arg1: i32) -> (i32, i32) {
    %c0_i32 = arith.constant 0 : i32
    return %arg0, %arg1 : i32, i32
  }
  func.func @transform_2(%arg0: i32, %arg1: i32) -> (i32, i32) {
    %c0_i32 = arith.constant 0 : i32
    return %arg0, %arg1 : i32, i32
  }
}

</mosaic_0001>

<llo_original>
// kernel: tpu_custom_call.1
$region0: #{tpu_custom_call.1}
  #allocation0 [shape = 'u32[]', space=smem, size = 0x4, offset = 0x4, fixed_abs, tag = 'smem constant byte address 0x4 - core index']
  #allocation1 [shape = 'u32[144,128]{1,0:T(1,128)}', space=vmem, size = 0x12000, scoped, tag = 'internal scratch']
  %s0 = inlined_call_operand.hbm [shape: f32[128,128], index: 0, kind: input, shape index: {}]
  %s1 = inlined_call_operand.hbm [shape: s8[128,256], index: 1, kind: input, shape index: {}]
  %s2 = inlined_call_operand.hbm [shape: f32[128,256], index: 2, kind: output, shape index: {}]
  %s3 = sld [smem:[#allocation0]]
  $region49: #{tpu_custom_call.1} parent=0
    _
  %s5 = ssub.s32 1, %s3
  %s6 = scalar_select 0, %s5, %s3
  $region1: #{tpu_custom_call.1} parent=0
    #allocation2 [shape = 'u8[65536]{0}', space=vmem, size = 0x10000, scoped, tag = 'input window, operand 0']
    #allocation3 [shape = 's32[2]{0}', space=sflag, size = 0x8, scoped, tag = 'scoped memory for tpu_custom_call.1']
    #allocation4 [shape = 's32[2]{0}', space=sflag, size = 0x8, scoped, tag = 'scoped memory for tpu_custom_call.1']
    #allocation5 [shape = 'u8[32768]{0}', space=vmem, size = 0x8000, scoped, tag = 'input window, operand 1']
    #allocation6 [shape = 's32[2]{0}', space=sflag, size = 0x8, scoped, tag = 'scoped memory for tpu_custom_call.1']
    #allocation7 [shape = 'u8[131072]{0}', space=vmem, size = 0x20000, scoped, tag = 'output window, operand 0']
    %7 = vsyncpa [#allocation3], 0
    %s8 = scalar_lea.sflag [#allocation3], 1
    %9 = vsyncpa %s8, 0
    %10 = vsyncpa [#allocation6], 0
    %s11 = scalar_lea.sflag [#allocation6], 1
    %12 = vsyncpa %s11, 0
    %13 = vsyncpa [#allocation4], 0
    %s14 = scalar_lea.sflag [#allocation4], 1
    %15 = vsyncpa %s14, 0
    loop: start=0, step=1, limit=4
    $region2: #{tpu_custom_call.1} parent=1 // loop_pre_header
      _
    $region3: #{tpu_custom_call.1} parent=1 // loop_header
      %s17 = sphi 0, %s21
      %p18 = scmp.ge.s32.totalorder %s17, 4
      %s24 = sphi 0, %s36
      %s25 = sphi 0, %s32
      %s26 = sphi 0, %s24
      %s27 = sphi 0, %s25
      %s28 = sphi 0, %s26
      %s29 = sphi 0, %s27
      %s39 = sphi 0, %s41
      %s42 = sphi 0, %s39
      %s43 = sphi 0, %s42
      %s59 = sphi 0, %s43
      %s67 = sphi 0, %s69
      %s70 = sphi 0, %s67
      %s71 = sphi 0, %s70
      %s87 = sphi 0, %s71
      %s95 = sphi 0, %s97
      %s98 = sphi 0, %s95
      %s99 = sphi 0, %s98
      %s115 = sphi 0, %s99
    $region4: #{tpu_custom_call.1} parent=1 // loop_header_branch
      %20 = sbr.rel (%p18) target = $region8
    $region5: #{tpu_custom_call.1} parent=1 // loop_body
      %s22 = ssub.s32 %s17, 1
      %s23 = ssub.s32 %s17, 2
      %s30 = sadd.s32 1, %s25
      %p31 = scmp.ge.s32.totalorder %s30, 1
      %s32 = scalar_select %p31, 0, %s30
      %s33 = sadd.s32 1, %s24
      %s34 = scalar_select %p31, %s33, %s24
      %p35 = scmp.ge.s32.totalorder %s34, 2
      %s36 = scalar_select %p35, 0, %s34
      %s37 = ssub.s32 %s24, %s36
      %p38 = scmp.eq.s32.totalorder %s37, 0
      %s40 = sadd.s32 %s39, 1
      %s41 = scalar_select %p38, %s39, %s40
      %p44 = pneg %p38
      %p45 = scmp.eq.s32.totalorder %s17, 1
      %p46 = por %p44, %p45
      %p47 = scmp.ne.s32.totalorder %s39, %s42
      %p48 = scmp.eq.s32.totalorder %s17, 0
      %p49 = por %p47, %p48
      %p50 = scmp.ne.s32.totalorder %s39, %s42
      %p51 = scmp.eq.s32.totalorder %s22, 1
      %p52 = por %p50, %p51
      %p53 = scmp.ne.s32.totalorder %s42, %s43
      %p54 = scmp.eq.s32.totalorder %s22, 0
      %p55 = por %p53, %p54
      %p56 = scmp.ne.s32.totalorder %s42, %s43
      %p57 = scmp.eq.s32.totalorder %s23, 1
      %p58 = por %p56, %p57
      %p60 = scmp.ne.s32.totalorder %s43, %s59
      %p61 = scmp.eq.s32.totalorder %s23, 0
      %p62 = por %p60, %p61
      %s63 = ssub.s32 %s24, %s36
      %s64 = ssub.s32 %s25, %s32
      %s65 = sor.u32 %s63, %s64
      %p66 = scmp.eq.s32.totalorder %s65, 0
      %s68 = sadd.s32 %s67, 1
      %s69 = scalar_select %p66, %s67, %s68
      %p72 = pneg %p66
      %p73 = scmp.eq.s32.totalorder %s17, 1
      %p74 = por %p72, %p73
      %p75 = scmp.ne.s32.totalorder %s67, %s70
      %p76 = scmp.eq.s32.totalorder %s17, 0
      %p77 = por %p75, %p76
      %p78 = scmp.ne.s32.totalorder %s67, %s70
      %p79 = scmp.eq.s32.totalorder %s22, 1
      %p80 = por %p78, %p79
      %p81 = scmp.ne.s32.totalorder %s70, %s71
      %p82 = scmp.eq.s32.totalorder %s22, 0
      %p83 = por %p81, %p82
      %p84 = scmp.ne.s32.totalorder %s70, %s71
      %p85 = scmp.eq.s32.totalorder %s23, 1
      %p86 = por %p84, %p85
      %p88 = scmp.ne.s32.totalorder %s71, %s87
      %p89 = scmp.eq.s32.totalorder %s23, 0
      %p90 = por %p88, %p89
      %s91 = ssub.s32 %s24, %s36
      %s92 = ssub.s32 %s25, %s32
      %s93 = sor.u32 %s91, %s92
      %p94 = scmp.eq.s32.totalorder %s93, 0
      %s96 = sadd.s32 %s95, 1
      %s97 = scalar_select %p94, %s95, %s96
      %p100 = pneg %p94
      %p101 = scmp.eq.s32.totalorder %s17, 1
      %p102 = por %p100, %p101
      %p103 = scmp.ne.s32.totalorder %s95, %s98
      %p104 = scmp.eq.s32.totalorder %s17, 0
      %p105 = por %p103, %p104
      %p106 = scmp.ne.s32.totalorder %s95, %s98
      %p107 = scmp.eq.s32.totalorder %s22, 1
      %p108 = por %p106, %p107
      %p109 = scmp.ne.s32.totalorder %s98, %s99
      %p110 = scmp.eq.s32.totalorder %s22, 0
      %p111 = por %p109, %p110
      %p112 = scmp.ne.s32.totalorder %s98, %s99
      %p113 = scmp.eq.s32.totalorder %s23, 1
      %p114 = por %p112, %p113
      %p116 = scmp.ne.s32.totalorder %s99, %s115
      %p117 = scmp.eq.s32.totalorder %s23, 0
      %p118 = por %p116, %p117
      %p119 = scmp.le.s32.totalorder 1, %s17
      %p120 = scmp.lt.s32.totalorder %s17, 3
      %p121 = pnand %p119, %p120
      %p122 = pneg %p121
      // Predicated region
      $region9: #{tpu_custom_call.1} parent=5 // pred_check
        _
      $region10: #{tpu_custom_call.1} parent=5 // pred_check_branch
        %124 = sbr.rel (%p121) target = $region12
      $region11: #{tpu_custom_call.1} parent=5 // pred_region
        %s125 = ssub.s32 %s17, 1
      $region12: #{tpu_custom_call.1} parent=5 // pred_fallthru
        _
      %p126 = scmp.lt.s32.totalorder %s17, 2
      // Predicated region
      $region13: #{tpu_custom_call.1} parent=5 // pred_check
        %p127 = pneg %p126
      $region14: #{tpu_custom_call.1} parent=5 // pred_check_branch
        %129 = sbr.rel (%p127) target = $region16
      $region15: #{tpu_custom_call.1} parent=5 // pred_region
        // Predicated region
        $region17: #{tpu_custom_call.1} parent=15 // pred_check
          %p130 = pneg %p49
        $region18: #{tpu_custom_call.1} parent=15 // pred_check_branch
          %132 = sbr.rel (%p130) target = $region20
        $region19: #{tpu_custom_call.1} parent=15 // pred_region
          %s133 = sand.u32 %s39, 1
          %s134 = scalar_lea.sflag [#allocation3], %s133
          %s135 = sand.u32 %s39, 1
          %s136 = smul.addr %s135, 64
          %s137 = scalar_lea.vmem [#allocation2], %s136
          %s138 = smul.u32 8, %s24
          %s140 = ssub.s32 1024, 1024
          %141 = vsyncadd %s134, %s140
          %s142 = smul.addr %s138, 128
          %s143 = scalar_lea.hbm %s0, %s142
          %s144 = sshll.u32 %s137, 4
          %s145 = int_to_ptr.vmem [resolvable:$true] %s144
          %150 = dma.hbm_to_vmem [thread:$0]  %s143, 1024, %s145, %s134, 128, 128, 8
        $region20: #{tpu_custom_call.1} parent=15 // pred_fallthru
          _
        // Predicated region
        $region21: #{tpu_custom_call.1} parent=15 // pred_check
          %p151 = pneg %p77
        $region22: #{tpu_custom_call.1} parent=15 // pred_check_branch
          %153 = sbr.rel (%p151) target = $region24
        $region23: #{tpu_custom_call.1} parent=15 // pred_region
          %s154 = sand.u32 %s67, 1
          %s155 = scalar_lea.sflag [#allocation6], %s154
          %s156 = sand.u32 %s67, 1
          %s157 = smul.addr %s156, 32
          %s158 = scalar_lea.vmem [#allocation5], %s157
          %s159 = smul.u32 2, %s24
          %s160 = smul.u32 2, %s25
          %s162 = ssub.s32 512, 512
          %163 = vsyncadd %s155, %s162
          %s164 = smul.addr %s159, 2
          %s165 = sadd.s32 %s160, %s164
          %s166 = smul.addr %s165, 128
          %s167 = scalar_lea.hbm %s1, %s166
          %s168 = sshll.u32 %s158, 4
          %s169 = int_to_ptr.vmem [resolvable:$true] %s168
          %174 = dma.hbm_to_vmem [thread:$0]  %s167, 512, %s169, %s155, 256, 256, 16
        $region24: #{tpu_custom_call.1} parent=15 // pred_fallthru
          _
      $region16: #{tpu_custom_call.1} parent=5 // pred_fallthru
        _
      %p175 = scmp.le.s32.totalorder 1, %s17
      %p176 = scmp.lt.s32.totalorder %s17, 3
      %p177 = pnand %p175, %p176
      %p178 = pneg %p177
      // Predicated region
      $region25: #{tpu_custom_call.1} parent=5 // pred_check
        _
      $region26: #{tpu_custom_call.1} parent=5 // pred_check_branch
        %180 = sbr.rel (%p177) target = $region28
      $region27: #{tpu_custom_call.1} parent=5 // pred_region
        %s181 = ssub.s32 %s17, 1
        %s182 = sand.u32 %s42, 1
        %s183 = scalar_lea.sflag [#allocation3], %s182
        %s184 = sand.u32 %s42, 1
        %s185 = smul.addr %s184, 64
        %s186 = scalar_lea.vmem [#allocation2], %s185
        // Predicated region
        $region29: #{tpu_custom_call.1} parent=27 // pred_check
          %p187 = pneg %p55
        $region30: #{tpu_custom_call.1} parent=27 // pred_check_branch
          %189 = sbr.rel (%p187) target = $region32
        $region31: #{tpu_custom_call.1} parent=27 // pred_region
          %190 = dma.done %s183, 1024
        $region32: #{tpu_custom_call.1} parent=27 // pred_fallthru
          _
        %s191 = sand.u32 %s70, 1
        %s192 = scalar_lea.sflag [#allocation6], %s191
        %s193 = sand.u32 %s70, 1
        %s194 = smul.addr %s193, 32
        %s195 = scalar_lea.vmem [#allocation5], %s194
        // Predicated region
        $region33: #{tpu_custom_call.1} parent=27 // pred_check
          %p196 = pneg %p83
        $region34: #{tpu_custom_call.1} parent=27 // pred_check_branch
          %198 = sbr.rel (%p196) target = $region36
        $region35: #{tpu_custom_call.1} parent=27 // pred_region
          %199 = dma.done %s192, 512
        $region36: #{tpu_custom_call.1} parent=27 // pred_fallthru
          _
        %s200 = sand.u32 %s42, 1
        %s201 = scalar_lea.sflag [#allocation3], %s200
        %s202 = sand.u32 %s42, 1
        %s203 = smul.addr %s202, 64
        %s204 = scalar_lea.vmem [#allocation2], %s203
        %p205 = pneg %p55
        %p206 = pneg %p52
        %s207 = sand.u32 %s70, 1
        %s208 = scalar_lea.sflag [#allocation6], %s207
        %s209 = sand.u32 %s70, 1
        %s210 = smul.addr %s209, 32
        %s211 = scalar_lea.vmem [#allocation5], %s210
        %p212 = pneg %p83
        %p213 = pneg %p80
        %p214 = pneg %p111
        %p215 = pneg %p108
        %s216 = sand.u32 %s98, 1
        %s217 = scalar_lea.sflag [#allocation4], %s216
        %s218 = sand.u32 %s98, 1
        %s219 = smul.addr %s218, 128
        %s220 = scalar_lea.vmem [#allocation7], %s219
        %s221 = smul.u32 8, %s26
        %s222 = smul.u32 2, %s26
        %s223 = smul.u32 2, %s27
        %s224 = smul.u32 8, %s26
        %s225 = smul.u32 2, %s27
        %v226 = vld [vmem:[%s186] sm:$0xff]
        %v227 = vld [vmem:[%s186 + $0x8] sm:$0xff]
        %v228 = vld [vmem:[%s186 + $0x10] sm:$0xff]
        %v229 = vld [vmem:[%s186 + $0x18] sm:$0xff]
        %v230 = vld [vmem:[%s186 + $0x20] sm:$0xff]
        %v231 = vld [vmem:[%s186 + $0x28] sm:$0xff]
        %v232 = vld [vmem:[%s186 + $0x30] sm:$0xff]
        %v233 = vld [vmem:[%s186 + $0x38] sm:$0xff]
        %v234 = vld [vmem:[%s195] sm:$0xff]
        %v235 = vld [vmem:[%s195 + $0x10] sm:$0xff]
        %v236 = vunpack.c.0.s8 %v234
        %v237 = vunpack.c.1.s8 %v234
        %v238 = vunpack.c.2.s8 %v234
        %v239 = vunpack.c.3.s8 %v234
        %v240 = vunpack.c.0.s8 %v235
        %v241 = vunpack.c.1.s8 %v235
        %v242 = vunpack.c.2.s8 %v235
        %v243 = vunpack.c.3.s8 %v235
        %v244 = vcvt.s32.f32 %v236
        %v245 = vcvt.s32.f32 %v237
        %v246 = vcvt.s32.f32 %v238
        %v247 = vcvt.s32.f32 %v239
        %v248 = vcvt.s32.f32 %v240
        %v249 = vcvt.s32.f32 %v241
        %v250 = vcvt.s32.f32 %v242
        %v251 = vcvt.s32.f32 %v243
        %v252 = vmul.f32 %v226, %v244
        %v253 = vmul.f32 %v227, %v245
        %v254 = vmul.f32 %v228, %v246
        %v255 = vmul.f32 %v229, %v247
        %v256 = vmul.f32 %v230, %v248
        %v257 = vmul.f32 %v231, %v249
        %v258 = vmul.f32 %v232, %v250
        %v259 = vmul.f32 %v233, %v251
        %260 = vst [vmem:[%s220] sm:$0xff] %v252
        %261 = vst [vmem:[%s220 + $0x10] sm:$0xff] %v253
        %262 = vst [vmem:[%s220 + $0x20] sm:$0xff] %v254
        %263 = vst [vmem:[%s220 + $0x30] sm:$0xff] %v255
        %264 = vst [vmem:[%s220 + $0x40] sm:$0xff] %v256
        %265 = vst [vmem:[%s220 + $0x50] sm:$0xff] %v257
        %266 = vst [vmem:[%s220 + $0x60] sm:$0xff] %v258
        %267 = vst [vmem:[%s220 + $0x70] sm:$0xff] %v259
        %v268 = vld [vmem:[%s195 + $0x8] sm:$0xff]
        %v269 = vld [vmem:[%s195 + $0x18] sm:$0xff]
        %v270 = vunpack.c.0.s8 %v268
        %v271 = vunpack.c.1.s8 %v268
        %v272 = vunpack.c.2.s8 %v268
        %v273 = vunpack.c.3.s8 %v268
        %v274 = vunpack.c.0.s8 %v269
        %v275 = vunpack.c.1.s8 %v269
        %v276 = vunpack.c.2.s8 %v269
        %v277 = vunpack.c.3.s8 %v269
        %v278 = vcvt.s32.f32 %v270
        %v279 = vcvt.s32.f32 %v271
        %v280 = vcvt.s32.f32 %v272
        %v281 = vcvt.s32.f32 %v273
        %v282 = vcvt.s32.f32 %v274
        %v283 = vcvt.s32.f32 %v275
        %v284 = vcvt.s32.f32 %v276
        %v285 = vcvt.s32.f32 %v277
        %v286 = vmul.f32 %v226, %v278
        %v287 = vmul.f32 %v227, %v279
        %v288 = vmul.f32 %v228, %v280
        %v289 = vmul.f32 %v229, %v281
        %v290 = vmul.f32 %v230, %v282
        %v291 = vmul.f32 %v231, %v283
        %v292 = vmul.f32 %v232, %v284
        %v293 = vmul.f32 %v233, %v285
        %294 = vst [vmem:[%s220 + $0x8] sm:$0xff] %v286
        %295 = vst [vmem:[%s220 + $0x18] sm:$0xff] %v287
        %296 = vst [vmem:[%s220 + $0x28] sm:$0xff] %v288
        %297 = vst [vmem:[%s220 + $0x38] sm:$0xff] %v289
        %298 = vst [vmem:[%s220 + $0x48] sm:$0xff] %v290
        %299 = vst [vmem:[%s220 + $0x58] sm:$0xff] %v291
        %300 = vst [vmem:[%s220 + $0x68] sm:$0xff] %v292
        %301 = vst [vmem:[%s220 + $0x78] sm:$0xff] %v293
        %s302 = sand.u32 %s98, 1
        %s303 = scalar_lea.sflag [#allocation4], %s302
        %s304 = sand.u32 %s98, 1
        %s305 = smul.addr %s304, 128
        %s306 = scalar_lea.vmem [#allocation7], %s305
        // Predicated region
        $region37: #{tpu_custom_call.1} parent=27 // pred_check
          %p307 = pneg %p108
        $region38: #{tpu_custom_call.1} parent=27 // pred_check_branch
          %309 = sbr.rel (%p307) target = $region40
        $region39: #{tpu_custom_call.1} parent=27 // pred_region
          %s310 = smul.u32 8, %s26
          %s311 = smul.u32 2, %s27
          %s313 = ssub.s32 2048, 2048
          %314 = vsyncadd %s303, %s313
          %s315 = smul.addr %s310, 2
          %s316 = sadd.s32 %s311, %s315
          %s317 = smul.addr %s316, 128
          %s318 = scalar_lea.hbm %s2, %s317
          %s319 = sshll.u32 %s306, 4
          %s320 = int_to_ptr.vmem [resolvable:$true] %s319
          %325 = dma.vmem_to_hbm [thread:$0]  %s320, 2048, %s318, %s303, 256, 256, 16
        $region40: #{tpu_custom_call.1} parent=27 // pred_fallthru
          _
      $region28: #{tpu_custom_call.1} parent=5 // pred_fallthru
        _
      %p326 = scmp.le.s32.totalorder 2, %s17
      // Predicated region
      $region41: #{tpu_custom_call.1} parent=5 // pred_check
        %p327 = pneg %p326
      $region42: #{tpu_custom_call.1} parent=5 // pred_check_branch
        %329 = sbr.rel (%p327) target = $region44
      $region43: #{tpu_custom_call.1} parent=5 // pred_region
        %s330 = ssub.s32 %s17, 2
        // Predicated region
        $region45: #{tpu_custom_call.1} parent=43 // pred_check
          %p331 = pneg %p114
        $region46: #{tpu_custom_call.1} parent=43 // pred_check_branch
          %333 = sbr.rel (%p331) target = $region48
        $region47: #{tpu_custom_call.1} parent=43 // pred_region
          %s334 = sand.u32 %s99, 1
          %s335 = scalar_lea.sflag [#allocation4], %s334
          %s336 = sand.u32 %s99, 1
          %s337 = smul.addr %s336, 128
          %s338 = scalar_lea.vmem [#allocation7], %s337
          %339 = dma.done %s335, 2048
        $region48: #{tpu_custom_call.1} parent=43 // pred_fallthru
          _
      $region44: #{tpu_custom_call.1} parent=5 // pred_fallthru
        _
    $region6: #{tpu_custom_call.1} parent=1 // loop_footer
      %s21 = sadd.s32 1, %s17
    $region7: #{tpu_custom_call.1} parent=1 // loop_footer_branch
      %16 = sbr.rel target = $region3
    $region8: #{tpu_custom_call.1} parent=1 // loop_exit
      _
    %340 = vsyncpa [#allocation3], 1
    %s341 = scalar_lea.sflag [#allocation3], 1
    %342 = vsyncpa %s341, 1
    %343 = vsyncpa [#allocation6], 1
    %s344 = scalar_lea.sflag [#allocation6], 1
    %345 = vsyncpa %s344, 1
    %346 = vsyncpa [#allocation4], 1
    %s347 = scalar_lea.sflag [#allocation4], 1
    %348 = vsyncpa %s347, 1

</llo_original>
